<compile_context>
chip_gen: v6e
topology: v6e:2x2x1
jax: 0.10.0
libtpu: 0.0.40
codegen_flags: <defaults>
</compile_context>

<pallas_src>
import functools

import jax
import jax.numpy as jnp
from jax.experimental import pallas as pl
from jax.experimental.pallas import tpu as pltpu

LN_EPS = 1e-5
LRELU_SLOPE = 0.01


def _round_up(x, m):
    return (x + m - 1) // m * m


def _mlp3_kernel(x_ref, w1_ref, w2_ref, w3_ref, p_ref, o_ref, *, n_true):
    # x_ref:  (tm, K1p)  bf16 row tile (zero-padded in K)
    # w*_ref: (Kp, Np)   bf16 weights, zero-padded rows/cols
    # p_ref:  (9,  Np)   f32 packed [b1,g1,be1, b2,g2,be2, b3,g3,be3]
    # o_ref:  (tm, Np)   output tile (lane-dense, Np multiple of 128)
    inv_n = jnp.float32(1.0 / n_true)
    p = p_ref[...]  # (9, Np) f32, loaded once

    def stack(h, w_ref, layer):
        # Linear (bf16 x bf16 -> f32 accumulate on the MXU)
        y = jnp.dot(h, w_ref[...], preferred_element_type=jnp.float32)
        b = p[3 * layer + 0:3 * layer + 1, :]
        g = p[3 * layer + 1:3 * layer + 2, :]
        be = p[3 * layer + 2:3 * layer + 3, :]
        y = y + b

        # LayerNorm over the true (unpadded) channels only.
        col = jax.lax.broadcasted_iota(jnp.int32, y.shape, 1)
        valid = col < n_true
        ym = jnp.where(valid, y, 0.0)
        mean = jnp.sum(ym, axis=-1, keepdims=True) * inv_n
        cen = jnp.where(valid, y - mean, 0.0)
        var = jnp.sum(cen * cen, axis=-1, keepdims=True) * inv_n
        yn = cen * jax.lax.rsqrt(var + LN_EPS) * g + be
        # Padded channels: cen=0, g=0, be=0 -> exactly 0 (stay 0 into next layer).

        # LeakyReLU (negative_slope = 0.01, torch default)
        return jnp.where(yn >= 0, yn, LRELU_SLOPE * yn)

    h = x_ref[...]  # bf16
    a1 = stack(h, w1_ref, 0).astype(h.dtype)   # back to bf16 for next MXU pass
    a2 = stack(a1, w2_ref, 1).astype(h.dtype)
    a3 = stack(a2, w3_ref, 2)                  # keep final activation in f32
    o_ref[...] = a3.astype(o_ref.dtype)


@functools.partial(jax.jit, static_argnames=("n_true", "tm"))
def mlp_apply(x, w1p, w2p, w3p, pp, *, n_true, tm=512):
    """x: (B, T, in_size) f32 -> (B, T, n_true) f32. Packed params from pack_mlp_params."""
    B, T, C = x.shape
    K1p, Np = w1p.shape
    assert C <= K1p and w2p.shape == (Np, Np) and w3p.shape == (Np, Np)
    assert tm % 8 == 0

    M = B * T
    tm_eff = min(tm, _round_up(M, 8))       # avoid huge over-padding for tiny inputs
    M_pad = _round_up(M, tm_eff)

    h = x.reshape(M, C).astype(w1p.dtype)   # bf16 for the MXU
    h = jnp.pad(h, ((0, M_pad - M), (0, K1p - C)))

    out_itemsize = jnp.dtype(x.dtype).itemsize
    w_itemsize = jnp.dtype(w1p.dtype).itemsize
    # Resident footprint (default pipeline double-buffers everything).
    resident = 2 * (
        (w1p.size + w2p.size + w3p.size) * w_itemsize
        + pp.size * 4
        + tm_eff * K1p * w_itemsize
        + tm_eff * Np * out_itemsize
    )
    vmem_limit = int(min(max(2 * resident, 32 * 1024 * 1024), 64 * 1024 * 1024))

    out = pl.pallas_call(
        functools.partial(_mlp3_kernel, n_true=n_true),
        out_shape=jax.ShapeDtypeStruct((M_pad, Np), x.dtype),
        grid_spec=pltpu.PrefetchScalarGridSpec(
            num_scalar_prefetch=0,
            grid=(M_pad // tm_eff,),
            in_specs=[
                pl.BlockSpec((tm_eff, K1p), lambda i: (i, 0)),   # streamed rows
                pl.BlockSpec((K1p, Np), lambda i: (0, 0)),       # resident W1
                pl.BlockSpec((Np, Np), lambda i: (0, 0)),        # resident W2
                pl.BlockSpec((Np, Np), lambda i: (0, 0)),        # resident W3
                pl.BlockSpec((9, Np), lambda i: (0, 0)),         # packed b/gamma/beta
            ],
            out_specs=pl.BlockSpec((tm_eff, Np), lambda i: (i, 0)),
        ),
        compiler_params=pltpu.CompilerParams(
            dimension_semantics=("parallel",),
            vmem_limit_bytes=vmem_limit,
        ),
    )(h, w1p, w2p, w3p, pp)

    return out[:M, :n_true].reshape(B, T, n_true)


def pack_mlp_params(params, compute_dtype=jnp.bfloat16):
    """Pad to lane multiples, cast weights to bf16, pack vectors into (9, Np).

    params: list of 3 tuples (w(K,N), b(N), gamma(N), beta(N)) in f32,
    with w stored as (in, out) so the kernel computes x @ w.
    """
    (w1, b1, g1, be1), (w2, b2, g2, be2), (w3, b3, g3, be3) = params
    K1, N = w1.shape
    assert w2.shape == (N, N) and w3.shape == (N, N)
    K1p = _round_up(K1, 128)
    Np = _round_up(N, 128)

    def pad_w(w, r, c):
        return jnp.pad(w, ((0, r - w.shape[0]), (0, c - w.shape[1])))

    def pad_v(v):
        return jnp.pad(v, (0, Np - v.shape[0]))

    w1p = pad_w(w1, K1p, Np).astype(compute_dtype)
    w2p = pad_w(w2, Np, Np).astype(compute_dtype)
    w3p = pad_w(w3, Np, Np).astype(compute_dtype)
    pp = jnp.stack(
        [pad_v(v) for v in (b1, g1, be1, b2, g2, be2, b3, g3, be3)]
    ).astype(jnp.float32)
    return w1p, w2p, w3p, pp, N


def init_mlp_params(key, in_size, hidden_size):
    """Deterministic synthetic params for the 3 stacks (f32, torch-like init)."""
    sizes = [(in_size, hidden_size),
             (hidden_size, hidden_size),
             (hidden_size, hidden_size)]
    params = []
    for i, (k_in, k_out) in enumerate(sizes):
        kw, kb, kg, kbt = jax.random.split(jax.random.fold_in(key, i), 4)
        bound = 1.0 / (k_in ** 0.5)
        w = jax.random.uniform(kw, (k_in, k_out), jnp.float32, -bound, bound)
        b = jax.random.uniform(kb, (k_out,), jnp.float32, -bound, bound)
        gamma = 1.0 + 0.1 * jax.random.normal(kg, (k_out,), jnp.float32)
        beta = 0.1 * jax.random.normal(kbt, (k_out,), jnp.float32)
        params.append((w, b, gamma, beta))
    return params


def _reference_f32(x, params):
    """Pure-f32 reference (matches the PyTorch module exactly)."""
    h = x
    for (w, b, g, be) in params:
        y = jnp.einsum("btk,kn->btn", h, w) + b
        mean = jnp.mean(y, axis=-1, keepdims=True)
        var = jnp.mean((y - mean) ** 2, axis=-1, keepdims=True)
        yn = (y - mean) * jax.lax.rsqrt(var + LN_EPS) * g + be
        h = jnp.where(yn >= 0, yn, LRELU_SLOPE * yn)
    return h


def _reference_bf16(x, params):
    """Reference replicating the kernel's bf16-matmul / f32-LN numerics."""
    B, T, C = x.shape
    h = x.reshape(B * T, C).astype(jnp.bfloat16)
    out = None
    for (w, b, g, be) in params:
        y = jnp.dot(h, w.astype(jnp.bfloat16),
                    preferred_element_type=jnp.float32) + b
        mean = jnp.mean(y, axis=-1, keepdims=True)
        var = jnp.mean((y - mean) ** 2, axis=-1, keepdims=True)
        yn = (y - mean) * jax.lax.rsqrt(var + LN_EPS) * g + be
        out = jnp.where(yn >= 0, yn, LRELU_SLOPE * yn)
        h = out.astype(jnp.bfloat16)
    return out.reshape(B, T, -1).astype(x.dtype)


if __name__ == "__main__":
    key = jax.random.PRNGKey(0)
    k_x, k_p = jax.random.split(key)

    B, T = 2, 8                 # 16 rows
    in_size, hidden = 16, 32    # padded to 128 lanes internally

    x = jax.random.normal(k_x, (B, T, in_size), jnp.float32)
    params = init_mlp_params(k_p, in_size, hidden)
    w1p, w2p, w3p, pp, n_true = pack_mlp_params(params)

    out = mlp_apply(x, w1p, w2p, w3p, pp, n_true=n_true, tm=512)
    out = jax.block_until_ready(out)
    assert out.shape == (B, T, hidden)

    # Tight check vs a reference using the same bf16-matmul / f32-LN numerics.
    ref_bf16 = _reference_bf16(x, params)
    assert jnp.allclose(out, ref_bf16, atol=5e-3, rtol=5e-3), "mismatch vs bf16 reference"

    # Loose sanity check vs the exact f32 (PyTorch-equivalent) reference.
    ref_f32 = _reference_f32(x, params)
    assert jnp.allclose(out, ref_f32, atol=1e-1, rtol=1e-1), "mismatch vs f32 reference"

    print("KERNEL_OK")
</pallas_src>

<mosaic_0001>
module attributes {stable_mosaic.version = 11 : i64} {
  func.func @_mlp3_kernel(%arg0: i32, %arg1: memref<16x128xbf16, #tpu.memory_space<vmem>>, %arg2: memref<128x128xbf16, #tpu.memory_space<vmem>>, %arg3: memref<128x128xbf16, #tpu.memory_space<vmem>>, %arg4: memref<128x128xbf16, #tpu.memory_space<vmem>>, %arg5: memref<9x128xf32, #tpu.memory_space<vmem>>, %arg6: memref<16x128xf32, #tpu.memory_space<vmem>>) attributes {dimension_semantics = [#tpu.dimension_semantics<parallel>], iteration_bounds = array<i64: 1>, scalar_prefetch = 0 : i64, scratch_operands = 0 : i64, tpu.core_type = #tpu.core_type<tc>, window_params = [{transform_indices = @transform_0, window_bounds = array<i64: 16, 128>}, {pipeline_mode = #tpu.pipeline_mode<synchronous>, transform_indices = @transform_1, window_bounds = array<i64: 128, 128>}, {pipeline_mode = #tpu.pipeline_mode<synchronous>, transform_indices = @transform_2, window_bounds = array<i64: 128, 128>}, {pipeline_mode = #tpu.pipeline_mode<synchronous>, transform_indices = @transform_3, window_bounds = array<i64: 128, 128>}, {pipeline_mode = #tpu.pipeline_mode<synchronous>, transform_indices = @transform_4, window_bounds = array<i64: 9, 128>}, {transform_indices = @transform_5, window_bounds = array<i64: 16, 128>}]} {
    %c0 = arith.constant 0 : index
    %c0_0 = arith.constant 0 : index
    %0 = vector.load %arg5[%c0, %c0_0] : memref<9x128xf32, #tpu.memory_space<vmem>>, vector<9x128xf32>
    %c0_1 = arith.constant 0 : index
    %c0_2 = arith.constant 0 : index
    %1 = vector.load %arg1[%c0_1, %c0_2] : memref<16x128xbf16, #tpu.memory_space<vmem>>, vector<16x128xbf16>
    %c0_3 = arith.constant 0 : index
    %c0_4 = arith.constant 0 : index
    %2 = vector.load %arg2[%c0_3, %c0_4] : memref<128x128xbf16, #tpu.memory_space<vmem>>, vector<128x128xbf16>
    %cst = arith.constant dense<0.000000e+00> : vector<16x128xf32>
    %3 = tpu.matmul %1, %2, %cst {dimension_numbers = #tpu.dot_dimension_numbers<[1], [0], [0], [1], [0, 0, 1, 1], [], []>} : vector<16x128xbf16>, vector<128x128xbf16>, vector<16x128xf32> -> vector<16x128xf32>
    %4 = vector.extract_strided_slice %0 {offsets = [0, 0], sizes = [1, 128], strides = [1, 1]} : vector<9x128xf32> to vector<1x128xf32>
    %5 = vector.extract_strided_slice %0 {offsets = [1, 0], sizes = [1, 128], strides = [1, 1]} : vector<9x128xf32> to vector<1x128xf32>
    %6 = vector.extract_strided_slice %0 {offsets = [2, 0], sizes = [1, 128], strides = [1, 1]} : vector<9x128xf32> to vector<1x128xf32>
    %7 = vector.broadcast %4 : vector<1x128xf32> to vector<16x128xf32>
    %8 = arith.addf %3, %7 : vector<16x128xf32>
    %9 = tpu.iota {dimensions = array<i32: 1>} : vector<16x128xi32>
    %c32_i32 = arith.constant 32 : i32
    %10 = vector.broadcast %c32_i32 : i32 to vector<16x128xi32>
    %11 = arith.cmpi slt, %9, %10 : vector<16x128xi32>
    %cst_5 = arith.constant 0.000000e+00 : f32
    %12 = vector.broadcast %cst_5 : f32 to vector<16x128xf32>
    %13 = arith.select %11, %8, %12 : vector<16x128xi1>, vector<16x128xf32>
    %cst_6 = arith.constant dense<0.000000e+00> : vector<16xf32>
    %14 = vector.multi_reduction <add>, %13, %cst_6 [1] : vector<16x128xf32> to vector<16xf32>
    %15 = vector.shape_cast %14 : vector<16xf32> to vector<16x1xf32>
    %cst_7 = arith.constant 3.125000e-02 : f32
    %16 = vector.broadcast %cst_7 : f32 to vector<16x1xf32>
    %17 = arith.mulf %15, %16 : vector<16x1xf32>
    %18 = vector.broadcast %17 : vector<16x1xf32> to vector<16x128xf32>
    %19 = arith.subf %8, %18 : vector<16x128xf32>
    %cst_8 = arith.constant 0.000000e+00 : f32
    %20 = vector.broadcast %cst_8 : f32 to vector<16x128xf32>
    %21 = arith.select %11, %19, %20 : vector<16x128xi1>, vector<16x128xf32>
    %22 = arith.mulf %21, %21 : vector<16x128xf32>
    %cst_9 = arith.constant dense<0.000000e+00> : vector<16xf32>
    %23 = vector.multi_reduction <add>, %22, %cst_9 [1] : vector<16x128xf32> to vector<16xf32>
    %24 = vector.shape_cast %23 : vector<16xf32> to vector<16x1xf32>
    %cst_10 = arith.constant 3.125000e-02 : f32
    %25 = vector.broadcast %cst_10 : f32 to vector<16x1xf32>
    %26 = arith.mulf %24, %25 : vector<16x1xf32>
    %cst_11 = arith.constant 9.99999974E-6 : f32
    %27 = vector.broadcast %cst_11 : f32 to vector<16x1xf32>
    %28 = arith.addf %26, %27 : vector<16x1xf32>
    %29 = math.rsqrt %28 : vector<16x1xf32>
    %30 = vector.broadcast %29 : vector<16x1xf32> to vector<16x128xf32>
    %31 = arith.mulf %21, %30 : vector<16x128xf32>
    %32 = vector.broadcast %5 : vector<1x128xf32> to vector<16x128xf32>
    %33 = arith.mulf %31, %32 : vector<16x128xf32>
    %34 = vector.broadcast %6 : vector<1x128xf32> to vector<16x128xf32>
    %35 = arith.addf %33, %34 : vector<16x128xf32>
    %cst_12 = arith.constant 0.000000e+00 : f32
    %36 = vector.broadcast %cst_12 : f32 to vector<16x128xf32>
    %37 = arith.cmpf oge, %35, %36 : vector<16x128xf32>
    %cst_13 = arith.constant 0.00999999977 : f32
    %38 = vector.broadcast %cst_13 : f32 to vector<16x128xf32>
    %39 = arith.mulf %38, %35 : vector<16x128xf32>
    %40 = arith.select %37, %35, %39 : vector<16x128xi1>, vector<16x128xf32>
    %41 = arith.truncf %40 : vector<16x128xf32> to vector<16x128xbf16>
    %c0_14 = arith.constant 0 : index
    %c0_15 = arith.constant 0 : index
    %42 = vector.load %arg3[%c0_14, %c0_15] : memref<128x128xbf16, #tpu.memory_space<vmem>>, vector<128x128xbf16>
    %cst_16 = arith.constant dense<0.000000e+00> : vector<16x128xf32>
    %43 = tpu.matmul %41, %42, %cst_16 {dimension_numbers = #tpu.dot_dimension_numbers<[1], [0], [0], [1], [0, 0, 1, 1], [], []>} : vector<16x128xbf16>, vector<128x128xbf16>, vector<16x128xf32> -> vector<16x128xf32>
    %44 = vector.extract_strided_slice %0 {offsets = [3, 0], sizes = [1, 128], strides = [1, 1]} : vector<9x128xf32> to vector<1x128xf32>
    %45 = vector.extract_strided_slice %0 {offsets = [4, 0], sizes = [1, 128], strides = [1, 1]} : vector<9x128xf32> to vector<1x128xf32>
    %46 = vector.extract_strided_slice %0 {offsets = [5, 0], sizes = [1, 128], strides = [1, 1]} : vector<9x128xf32> to vector<1x128xf32>
    %47 = vector.broadcast %44 : vector<1x128xf32> to vector<16x128xf32>
    %48 = arith.addf %43, %47 : vector<16x128xf32>
    %49 = tpu.iota {dimensions = array<i32: 1>} : vector<16x128xi32>
    %c32_i32_17 = arith.constant 32 : i32
    %50 = vector.broadcast %c32_i32_17 : i32 to vector<16x128xi32>
    %51 = arith.cmpi slt, %49, %50 : vector<16x128xi32>
    %cst_18 = arith.constant 0.000000e+00 : f32
    %52 = vector.broadcast %cst_18 : f32 to vector<16x128xf32>
    %53 = arith.select %51, %48, %52 : vector<16x128xi1>, vector<16x128xf32>
    %cst_19 = arith.constant dense<0.000000e+00> : vector<16xf32>
    %54 = vector.multi_reduction <add>, %53, %cst_19 [1] : vector<16x128xf32> to vector<16xf32>
    %55 = vector.shape_cast %54 : vector<16xf32> to vector<16x1xf32>
    %cst_20 = arith.constant 3.125000e-02 : f32
    %56 = vector.broadcast %cst_20 : f32 to vector<16x1xf32>
    %57 = arith.mulf %55, %56 : vector<16x1xf32>
    %58 = vector.broadcast %57 : vector<16x1xf32> to vector<16x128xf32>
    %59 = arith.subf %48, %58 : vector<16x128xf32>
    %cst_21 = arith.constant 0.000000e+00 : f32
    %60 = vector.broadcast %cst_21 : f32 to vector<16x128xf32>
    %61 = arith.select %51, %59, %60 : vector<16x128xi1>, vector<16x128xf32>
    %62 = arith.mulf %61, %61 : vector<16x128xf32>
    %cst_22 = arith.constant dense<0.000000e+00> : vector<16xf32>
    %63 = vector.multi_reduction <add>, %62, %cst_22 [1] : vector<16x128xf32> to vector<16xf32>
    %64 = vector.shape_cast %63 : vector<16xf32> to vector<16x1xf32>
    %cst_23 = arith.constant 3.125000e-02 : f32
    %65 = vector.broadcast %cst_23 : f32 to vector<16x1xf32>
    %66 = arith.mulf %64, %65 : vector<16x1xf32>
    %cst_24 = arith.constant 9.99999974E-6 : f32
    %67 = vector.broadcast %cst_24 : f32 to vector<16x1xf32>
    %68 = arith.addf %66, %67 : vector<16x1xf32>
    %69 = math.rsqrt %68 : vector<16x1xf32>
    %70 = vector.broadcast %69 : vector<16x1xf32> to vector<16x128xf32>
    %71 = arith.mulf %61, %70 : vector<16x128xf32>
    %72 = vector.broadcast %45 : vector<1x128xf32> to vector<16x128xf32>
    %73 = arith.mulf %71, %72 : vector<16x128xf32>
    %74 = vector.broadcast %46 : vector<1x128xf32> to vector<16x128xf32>
    %75 = arith.addf %73, %74 : vector<16x128xf32>
    %cst_25 = arith.constant 0.000000e+00 : f32
    %76 = vector.broadcast %cst_25 : f32 to vector<16x128xf32>
    %77 = arith.cmpf oge, %75, %76 : vector<16x128xf32>
    %cst_26 = arith.constant 0.00999999977 : f32
    %78 = vector.broadcast %cst_26 : f32 to vector<16x128xf32>
    %79 = arith.mulf %78, %75 : vector<16x128xf32>
    %80 = arith.select %77, %75, %79 : vector<16x128xi1>, vector<16x128xf32>
    %81 = arith.truncf %80 : vector<16x128xf32> to vector<16x128xbf16>
    %c0_27 = arith.constant 0 : index
    %c0_28 = arith.constant 0 : index
    %82 = vector.load %arg4[%c0_27, %c0_28] : memref<128x128xbf16, #tpu.memory_space<vmem>>, vector<128x128xbf16>
    %cst_29 = arith.constant dense<0.000000e+00> : vector<16x128xf32>
    %83 = tpu.matmul %81, %82, %cst_29 {dimension_numbers = #tpu.dot_dimension_numbers<[1], [0], [0], [1], [0, 0, 1, 1], [], []>} : vector<16x128xbf16>, vector<128x128xbf16>, vector<16x128xf32> -> vector<16x128xf32>
    %84 = vector.extract_strided_slice %0 {offsets = [6, 0], sizes = [1, 128], strides = [1, 1]} : vector<9x128xf32> to vector<1x128xf32>
    %85 = vector.extract_strided_slice %0 {offsets = [7, 0], sizes = [1, 128], strides = [1, 1]} : vector<9x128xf32> to vector<1x128xf32>
    %86 = vector.extract_strided_slice %0 {offsets = [8, 0], sizes = [1, 128], strides = [1, 1]} : vector<9x128xf32> to vector<1x128xf32>
    %87 = vector.broadcast %84 : vector<1x128xf32> to vector<16x128xf32>
    %88 = arith.addf %83, %87 : vector<16x128xf32>
    %89 = tpu.iota {dimensions = array<i32: 1>} : vector<16x128xi32>
    %c32_i32_30 = arith.constant 32 : i32
    %90 = vector.broadcast %c32_i32_30 : i32 to vector<16x128xi32>
    %91 = arith.cmpi slt, %89, %90 : vector<16x128xi32>
    %cst_31 = arith.constant 0.000000e+00 : f32
    %92 = vector.broadcast %cst_31 : f32 to vector<16x128xf32>
    %93 = arith.select %91, %88, %92 : vector<16x128xi1>, vector<16x128xf32>
    %cst_32 = arith.constant dense<0.000000e+00> : vector<16xf32>
    %94 = vector.multi_reduction <add>, %93, %cst_32 [1] : vector<16x128xf32> to vector<16xf32>
    %95 = vector.shape_cast %94 : vector<16xf32> to vector<16x1xf32>
    %cst_33 = arith.constant 3.125000e-02 : f32
    %96 = vector.broadcast %cst_33 : f32 to vector<16x1xf32>
    %97 = arith.mulf %95, %96 : vector<16x1xf32>
    %98 = vector.broadcast %97 : vector<16x1xf32> to vector<16x128xf32>
    %99 = arith.subf %88, %98 : vector<16x128xf32>
    %cst_34 = arith.constant 0.000000e+00 : f32
    %100 = vector.broadcast %cst_34 : f32 to vector<16x128xf32>
    %101 = arith.select %91, %99, %100 : vector<16x128xi1>, vector<16x128xf32>
    %102 = arith.mulf %101, %101 : vector<16x128xf32>
    %cst_35 = arith.constant dense<0.000000e+00> : vector<16xf32>
    %103 = vector.multi_reduction <add>, %102, %cst_35 [1] : vector<16x128xf32> to vector<16xf32>
    %104 = vector.shape_cast %103 : vector<16xf32> to vector<16x1xf32>
    %cst_36 = arith.constant 3.125000e-02 : f32
    %105 = vector.broadcast %cst_36 : f32 to vector<16x1xf32>
    %106 = arith.mulf %104, %105 : vector<16x1xf32>
    %cst_37 = arith.constant 9.99999974E-6 : f32
    %107 = vector.broadcast %cst_37 : f32 to vector<16x1xf32>
    %108 = arith.addf %106, %107 : vector<16x1xf32>
    %109 = math.rsqrt %108 : vector<16x1xf32>
    %110 = vector.broadcast %109 : vector<16x1xf32> to vector<16x128xf32>
    %111 = arith.mulf %101, %110 : vector<16x128xf32>
    %112 = vector.broadcast %85 : vector<1x128xf32> to vector<16x128xf32>
    %113 = arith.mulf %111, %112 : vector<16x128xf32>
    %114 = vector.broadcast %86 : vector<1x128xf32> to vector<16x128xf32>
    %115 = arith.addf %113, %114 : vector<16x128xf32>
    %cst_38 = arith.constant 0.000000e+00 : f32
    %116 = vector.broadcast %cst_38 : f32 to vector<16x128xf32>
    %117 = arith.cmpf oge, %115, %116 : vector<16x128xf32>
    %cst_39 = arith.constant 0.00999999977 : f32
    %118 = vector.broadcast %cst_39 : f32 to vector<16x128xf32>
    %119 = arith.mulf %118, %115 : vector<16x128xf32>
    %120 = arith.select %117, %115, %119 : vector<16x128xi1>, vector<16x128xf32>
    %c0_40 = arith.constant 0 : index
    %c0_41 = arith.constant 0 : index
    %121 = vector.load %arg6[%c0_40, %c0_41] : memref<16x128xf32, #tpu.memory_space<vmem>>, vector<16x128xf32>
    tpu.vector_store %arg6[%c0_40, %c0_41], %120 {strides = array<i32>} : memref<16x128xf32, #tpu.memory_space<vmem>>, vector<16x128xf32>,
    return
  }
  func.func @transform_0(%arg0: i32) -> (i32, i32) {
    %c0_i32 = arith.constant 0 : i32
    %c0_i32_0 = arith.constant 0 : i32
    return %arg0, %c0_i32 : i32, i32
  }
  func.func @transform_1(%arg0: i32) -> (i32, i32) {
    %c0_i32 = arith.constant 0 : i32
    %c0_i32_0 = arith.constant 0 : i32
    %c0_i32_1 = arith.constant 0 : i32
    return %c0_i32, %c0_i32_0 : i32, i32
  }
  func.func @transform_2(%arg0: i32) -> (i32, i32) {
    %c0_i32 = arith.constant 0 : i32
    %c0_i32_0 = arith.constant 0 : i32
    %c0_i32_1 = arith.constant 0 : i32
    return %c0_i32, %c0_i32_0 : i32, i32
  }
  func.func @transform_3(%arg0: i32) -> (i32, i32) {
    %c0_i32 = arith.constant 0 : i32
    %c0_i32_0 = arith.constant 0 : i32
    %c0_i32_1 = arith.constant 0 : i32
    return %c0_i32, %c0_i32_0 : i32, i32
  }
  func.func @transform_4(%arg0: i32) -> (i32, i32) {
    %c0_i32 = arith.constant 0 : i32
    %c0_i32_0 = arith.constant 0 : i32
    %c0_i32_1 = arith.constant 0 : i32
    return %c0_i32, %c0_i32_0 : i32, i32
  }
  func.func @transform_5(%arg0: i32) -> (i32, i32) {
    %c0_i32 = arith.constant 0 : i32
    %c0_i32_0 = arith.constant 0 : i32
    return %arg0, %c0_i32 : i32, i32
  }
}

</mosaic_0001>

<llo_original>
// kernel: mlp_apply.1
$region0: #{mlp_apply.1}
  #allocation0 [shape = 'u32[]', space=smem, size = 0x4, offset = 0x4, fixed_abs, tag = 'smem constant byte address 0x4 - core index']
  #allocation1 [shape = 'u32[144,128]{1,0:T(1,128)}', space=vmem, size = 0x12000, scoped, tag = 'internal scratch']
  %s0 = inlined_call_operand.vmem [shape: bf16[16,128], index: 0, kind: input, shape index: {}]
  %s1 = inlined_call_operand.hbm [shape: bf16[128,128], index: 1, kind: input, shape index: {}]
  %s2 = inlined_call_operand.hbm [shape: bf16[128,128], index: 2, kind: input, shape index: {}]
  %s3 = inlined_call_operand.hbm [shape: bf16[128,128], index: 3, kind: input, shape index: {}]
  %s4 = inlined_call_operand.vmem [shape: f32[9,128], index: 4, kind: input, shape index: {}]
  %s5 = inlined_call_operand.vmem [shape: f32[16,128], index: 5, kind: output, shape index: {}]
  %s6 = sld [smem:[#allocation0]]
  $region42: #{mlp_apply.1} parent=0
    _
  %s8 = ssub.s32 1, %s6
  %s9 = scalar_select 0, %s8, %s6
  $region1: #{mlp_apply.1} parent=0
    #allocation2 [shape = 'u8[32768]{0}', space=vmem, size = 0x8000, scoped, tag = 'input window, operand 1, single buffered']
    #allocation3 [shape = 's32[1]{0}', space=sflag, size = 0x4, scoped, tag = 'scoped memory for mlp_apply.1']
    #allocation4 [shape = 'u8[32768]{0}', space=vmem, size = 0x8000, scoped, tag = 'input window, operand 2, single buffered']
    #allocation5 [shape = 's32[1]{0}', space=sflag, size = 0x4, scoped, tag = 'scoped memory for mlp_apply.1']
    #allocation6 [shape = 'u8[32768]{0}', space=vmem, size = 0x8000, scoped, tag = 'input window, operand 3, single buffered']
    %10 = vsyncpa [#allocation3], 0
    %11 = vsyncpa [#allocation5], 0
    // Predicated region
    $region2: #{mlp_apply.1} parent=1 // pred_check
      _
    $region3: #{mlp_apply.1} parent=1 // pred_check_branch
      %13 = sbr.rel (0) target = $region5
    $region4: #{mlp_apply.1} parent=1 // pred_region
      _
    $region5: #{mlp_apply.1} parent=1 // pred_fallthru
      _
    // Predicated region
    $region6: #{mlp_apply.1} parent=1 // pred_check
      _
    $region7: #{mlp_apply.1} parent=1 // pred_check_branch
      %15 = sbr.rel (0) target = $region9
    $region8: #{mlp_apply.1} parent=1 // pred_region
      %s17 = ssub.s32 1024, 1024
      %18 = vsyncadd [#allocation3], %s17
      %s19 = sshll.u32 [#allocation2], 4
      %s20 = int_to_ptr.vmem [resolvable:$true] %s19
      %25 = dma.hbm_to_vmem [thread:$0]  %s1, 1024, %s20, [#allocation3], 64, 64, 4
    $region9: #{mlp_apply.1} parent=1 // pred_fallthru
      _
    // Predicated region
    $region10: #{mlp_apply.1} parent=1 // pred_check
      _
    $region11: #{mlp_apply.1} parent=1 // pred_check_branch
      %27 = sbr.rel (0) target = $region13
    $region12: #{mlp_apply.1} parent=1 // pred_region
      %s29 = ssub.s32 1024, 1024
      %30 = vsyncadd [#allocation5], %s29
      %s31 = sshll.u32 [#allocation4], 4
      %s32 = int_to_ptr.vmem [resolvable:$true] %s31
      %37 = dma.hbm_to_vmem [thread:$0]  %s2, 1024, %s32, [#allocation5], 64, 64, 4
    $region13: #{mlp_apply.1} parent=1 // pred_fallthru
      _
    // Predicated region
    $region14: #{mlp_apply.1} parent=1 // pred_check
      _
    $region15: #{mlp_apply.1} parent=1 // pred_check_branch
      %39 = sbr.rel (0) target = $region17
    $region16: #{mlp_apply.1} parent=1 // pred_region
      %s41 = ssub.s32 1024, 1024
      %42 = vsyncadd [#allocation5], %s41
      %s43 = sshll.u32 [#allocation6], 4
      %s44 = int_to_ptr.vmem [resolvable:$true] %s43
      %49 = dma.hbm_to_vmem [thread:$0]  %s3, 1024, %s44, [#allocation5], 64, 64, 4
    $region17: #{mlp_apply.1} parent=1 // pred_fallthru
      _
    // Predicated region
    $region18: #{mlp_apply.1} parent=1 // pred_check
      _
    $region19: #{mlp_apply.1} parent=1 // pred_check_branch
      %51 = sbr.rel (0) target = $region21
    $region20: #{mlp_apply.1} parent=1 // pred_region
      _
    $region21: #{mlp_apply.1} parent=1 // pred_fallthru
      _
    // Predicated region
    $region22: #{mlp_apply.1} parent=1 // pred_check
      _
    $region23: #{mlp_apply.1} parent=1 // pred_check_branch
      %53 = sbr.rel (0) target = $region25
    $region24: #{mlp_apply.1} parent=1 // pred_region
      %54 = dma.done [#allocation3], 1024
    $region25: #{mlp_apply.1} parent=1 // pred_fallthru
      _
    // Predicated region
    $region26: #{mlp_apply.1} parent=1 // pred_check
      _
    $region27: #{mlp_apply.1} parent=1 // pred_check_branch
      %56 = sbr.rel (0) target = $region29
    $region28: #{mlp_apply.1} parent=1 // pred_region
      %57 = dma.done [#allocation5], 1024
    $region29: #{mlp_apply.1} parent=1 // pred_fallthru
      _
    // Predicated region
    $region30: #{mlp_apply.1} parent=1 // pred_check
      _
    $region31: #{mlp_apply.1} parent=1 // pred_check_branch
      %59 = sbr.rel (0) target = $region33
    $region32: #{mlp_apply.1} parent=1 // pred_region
      %60 = dma.done [#allocation5], 1024
    $region33: #{mlp_apply.1} parent=1 // pred_fallthru
      _
    %v62 = vld [vmem:[%s4] sm:$0xff]
    %v63 = vld [vmem:[%s4 + $0x8] sm:$0x1]
    %v64 = vld [vmem:[%s0] sm:$0xf]
    %v65 = vld [vmem:[%s0 + $0x4] sm:$0xf]
    %v66 = vld [vmem:[#allocation2] sm:$0xf]
    %v67 = vld [vmem:[#allocation2 + $0x4] sm:$0xf]
    %v68 = vld [vmem:[#allocation2 + $0x8] sm:$0xf]
    %v69 = vld [vmem:[#allocation2 + $0xc] sm:$0xf]
    %v70 = vld [vmem:[#allocation2 + $0x10] sm:$0xf]
    %v71 = vld [vmem:[#allocation2 + $0x14] sm:$0xf]
    %v72 = vld [vmem:[#allocation2 + $0x18] sm:$0xf]
    %v73 = vld [vmem:[#allocation2 + $0x1c] sm:$0xf]
    %v74 = vld [vmem:[#allocation2 + $0x20] sm:$0xf]
    %v75 = vld [vmem:[#allocation2 + $0x24] sm:$0xf]
    %v76 = vld [vmem:[#allocation2 + $0x28] sm:$0xf]
    %v77 = vld [vmem:[#allocation2 + $0x2c] sm:$0xf]
    %v78 = vld [vmem:[#allocation2 + $0x30] sm:$0xf]
    %v79 = vld [vmem:[#allocation2 + $0x34] sm:$0xf]
    %v80 = vld [vmem:[#allocation2 + $0x38] sm:$0xf]
    %v81 = vld [vmem:[#allocation2 + $0x3c] sm:$0xf]
    %v82 = vlaneseq
    %v83 = vshrl.u32 %v82, 7
    %v84 = vsub.s32 0, %v83
    %v85 = vrot.slane %v62, %v84
    %v88 = vunpack.c.l.b16 %v64
    %v89 = vunpack.c.l.b16 %v65
    %v90 = vpack.c.b16 %v89, %v88
    %v108 = vunpack.c.l.b16 %v66
    %v109 = vunpack.c.l.b16 %v67
    %v110 = vunpack.c.l.b16 %v68
    %v111 = vunpack.c.l.b16 %v69
    %v112 = vunpack.c.l.b16 %v70
    %v113 = vunpack.c.l.b16 %v71
    %v114 = vunpack.c.l.b16 %v72
    %v115 = vunpack.c.l.b16 %v73
    %v116 = vunpack.c.l.b16 %v74
    %v117 = vunpack.c.l.b16 %v75
    %v118 = vunpack.c.l.b16 %v76
    %v119 = vunpack.c.l.b16 %v77
    %v120 = vunpack.c.l.b16 %v78
    %v121 = vunpack.c.l.b16 %v79
    %v122 = vunpack.c.l.b16 %v80
    %v123 = vunpack.c.l.b16 %v81
    %v124 = vpack.c.b16 %v109, %v108
    %v125 = vpack.c.b16 %v111, %v110
    %v126 = vpack.c.b16 %v113, %v112
    %v127 = vpack.c.b16 %v115, %v114
    %v128 = vpack.c.b16 %v117, %v116
    %v129 = vpack.c.b16 %v119, %v118
    %v130 = vpack.c.b16 %v121, %v120
    %v131 = vpack.c.b16 %v123, %v122
    %140 = vmatprep.subr.bf16.mxu0 0
    %141 = vmatpush1.bf16.msra.mxu0 %v131
    %142 = vmatprep.subr.bf16.mxu0 0
    %143 = vmatpush1.bf16.msra.mxu0 %v130
    %144 = vmatprep.subr.bf16.mxu0 0
    %145 = vmatpush1.bf16.msra.mxu0 %v129
    %146 = vmatprep.subr.bf16.mxu0 0
    %147 = vmatpush1.bf16.msra.mxu0 %v128
    %148 = vmatprep.subr.bf16.mxu0 0
    %149 = vmatpush1.bf16.msra.mxu0 %v127
    %150 = vmatprep.subr.bf16.mxu0 0
    %151 = vmatpush1.bf16.msra.mxu0 %v126
    %152 = vmatprep.subr.bf16.mxu0 0
    %153 = vmatpush1.bf16.msra.mxu0 %v125
    %154 = vmatprep.subr.bf16.mxu0 0
    %155 = vmatpush1.bf16.msra.mxu0 %v124
    %156 = vmatprep.subr.bf16.mxu0 0
    %157 = vmatpush2.bf16.msra.mxu0 0
    %158 = vmatprep.subr.bf16.mxu0 0
    %159 = vmatpush2.bf16.msra.mxu0 0
    %160 = vmatprep.subr.bf16.mxu0 0
    %161 = vmatpush2.bf16.msra.mxu0 0
    %162 = vmatprep.subr.bf16.mxu0 0
    %163 = vmatpush2.bf16.msra.mxu0 0
    %164 = vmatprep.subr.bf16.mxu0 0
    %165 = vmatpush2.bf16.msra.mxu0 0
    %166 = vmatprep.subr.bf16.mxu0 0
    %167 = vmatpush2.bf16.msra.mxu0 0
    %168 = vmatprep.subr.bf16.mxu0 0
    %169 = vmatpush2.bf16.msra.mxu0 0
    %170 = vmatprep.subr.bf16.mxu0 0
    %171 = vmatpush2.bf16.msra.mxu0 0
    %172 = vmatprep.mubr.bf16.mxu0 0
    %173 = vmatmul.mubr.bf16.gmra.mxu0 %v90
    %v174 = vpop.f32.mrf.mxu0
    %v175 = vadd.f32 %v85, %v174
    %v176 = vpop.f32.mrf.mxu0
    %v177 = vpop.f32.mrf.mxu0
    %v178 = vadd.f32 %v85, %v177
    %v179 = vpop.f32.mrf.mxu0
    %180 = vdwg.mxu0
    %v181 = vlaneseq
    %v182 = vand.u32 %v181, 127
    %vm183 = vcmp.lt.s32.totalorder %v182, 32
    %v184 = vsel %vm183, %v175, 0.0
    %v185 = vsel %vm183, %v178, 0.0
    %186 = vadd.xlane.f32.xlu0 %v184
    %v187 = vpop.xlane.xlu0 %186
    %188 = vadd.xlane.f32.xlu0 %v185
    %v189 = vpop.xlane.xlu0 %188
    %v190 = vmul.f32 %v187, 0.03125
    %v191 = vmul.f32 %v189, 0.03125
    %v192 = vsub.f32 %v175, %v190
    %v193 = vsub.f32 %v178, %v191
    %v194 = vsel %vm183, %v192, 0.0
    %v195 = vsel %vm183, %v193, 0.0
    %v196 = vmul.f32 %v194, %v194
    %v197 = vmul.f32 %v195, %v195
    %198 = vadd.xlane.f32.xlu0 %v196
    %v199 = vpop.xlane.xlu0 %198
    %200 = vadd.xlane.f32.xlu0 %v197
    %v201 = vpop.xlane.xlu0 %200
    %v202 = vmul.f32 %v199, 0.03125
    %v203 = vmul.f32 %v201, 0.03125
    %v204 = vadd.f32 %v202, 1e-05
    %v205 = vadd.f32 %v203, 1e-05
    %v206 = vrsqrt.pop %v204
    %v207 = vrsqrt.pop %v205
    %v208 = vmul.f32 %v194, %v206
    %v209 = vmul.f32 %v195, %v207
    %v210 = vlaneseq
    %v211 = vshrl.u32 %v210, 7
    %v212 = vsub.s32 1, %v211
    %v213 = vrot.slane %v62, %v212
    %v214 = vmul.f32 %v208, %v213
    %v215 = vmul.f32 %v209, %v213
    %v216 = vlaneseq
    %v217 = vshrl.u32 %v216, 7
    %v218 = vsub.s32 2, %v217
    %v219 = vrot.slane %v62, %v218
    %v220 = vadd.f32 %v214, %v219
    %v221 = vadd.f32 %v215, %v219
    %vm222 = vcmp.ge.f32.partialorder %v220, 0.0
    %vm223 = vcmp.ge.f32.partialorder %v221, 0.0
    %v224 = vmul.f32 %v220, 0.01
    %v225 = vmul.f32 %v221, 0.01
    %v226 = vsel %vm222, %v220, %v224
    %v227 = vsel %vm223, %v221, %v225
    %v228 = vpack.c.bf16 %v227, %v226
    %v229 = vld [vmem:[#allocation4] sm:$0xf]
    %v230 = vld [vmem:[#allocation4 + $0x4] sm:$0xf]
    %v231 = vld [vmem:[#allocation4 + $0x8] sm:$0xf]
    %v232 = vld [vmem:[#allocation4 + $0xc] sm:$0xf]
    %v233 = vld [vmem:[#allocation4 + $0x10] sm:$0xf]
    %v234 = vld [vmem:[#allocation4 + $0x14] sm:$0xf]
    %v235 = vld [vmem:[#allocation4 + $0x18] sm:$0xf]
    %v236 = vld [vmem:[#allocation4 + $0x1c] sm:$0xf]
    %v237 = vld [vmem:[#allocation4 + $0x20] sm:$0xf]
    %v238 = vld [vmem:[#allocation4 + $0x24] sm:$0xf]
    %v239 = vld [vmem:[#allocation4 + $0x28] sm:$0xf]
    %v240 = vld [vmem:[#allocation4 + $0x2c] sm:$0xf]
    %v241 = vld [vmem:[#allocation4 + $0x30] sm:$0xf]
    %v242 = vld [vmem:[#allocation4 + $0x34] sm:$0xf]
    %v243 = vld [vmem:[#allocation4 + $0x38] sm:$0xf]
    %v244 = vld [vmem:[#allocation4 + $0x3c] sm:$0xf]
    %v245 = vlaneseq
    %v246 = vshrl.u32 %v245, 7
    %v247 = vsub.s32 3, %v246
    %v248 = vrot.slane %v62, %v247
    %v265 = vunpack.c.l.b16 %v229
    %v266 = vunpack.c.l.b16 %v230
    %v267 = vunpack.c.l.b16 %v231
    %v268 = vunpack.c.l.b16 %v232
    %v269 = vunpack.c.l.b16 %v233
    %v270 = vunpack.c.l.b16 %v234
    %v271 = vunpack.c.l.b16 %v235
    %v272 = vunpack.c.l.b16 %v236
    %v273 = vunpack.c.l.b16 %v237
    %v274 = vunpack.c.l.b16 %v238
    %v275 = vunpack.c.l.b16 %v239
    %v276 = vunpack.c.l.b16 %v240
    %v277 = vunpack.c.l.b16 %v241
    %v278 = vunpack.c.l.b16 %v242
    %v279 = vunpack.c.l.b16 %v243
    %v280 = vunpack.c.l.b16 %v244
    %v281 = vpack.c.b16 %v266, %v265
    %v282 = vpack.c.b16 %v268, %v267
    %v283 = vpack.c.b16 %v270, %v269
    %v284 = vpack.c.b16 %v272, %v271
    %v285 = vpack.c.b16 %v274, %v273
    %v286 = vpack.c.b16 %v276, %v275
    %v287 = vpack.c.b16 %v278, %v277
    %v288 = vpack.c.b16 %v280, %v279
    %297 = vmatprep.subr.bf16.mxu0 0
    %298 = vmatpush1.bf16.msra.mxu0 %v288
    %299 = vmatprep.subr.bf16.mxu0 0
    %300 = vmatpush1.bf16.msra.mxu0 %v287
    %301 = vmatprep.subr.bf16.mxu0 0
    %302 = vmatpush1.bf16.msra.mxu0 %v286
    %303 = vmatprep.subr.bf16.mxu0 0
    %304 = vmatpush1.bf16.msra.mxu0 %v285
    %305 = vmatprep.subr.bf16.mxu0 0
    %306 = vmatpush1.bf16.msra.mxu0 %v284
    %307 = vmatprep.subr.bf16.mxu0 0
    %308 = vmatpush1.bf16.msra.mxu0 %v283
    %309 = vmatprep.subr.bf16.mxu0 0
    %310 = vmatpush1.bf16.msra.mxu0 %v282
    %311 = vmatprep.subr.bf16.mxu0 0
    %312 = vmatpush1.bf16.msra.mxu0 %v281
    %313 = vmatprep.subr.bf16.mxu0 0
    %314 = vmatpush2.bf16.msra.mxu0 0
    %315 = vmatprep.subr.bf16.mxu0 0
    %316 = vmatpush2.bf16.msra.mxu0 0
    %317 = vmatprep.subr.bf16.mxu0 0
    %318 = vmatpush2.bf16.msra.mxu0 0
    %319 = vmatprep.subr.bf16.mxu0 0
    %320 = vmatpush2.bf16.msra.mxu0 0
    %321 = vmatprep.subr.bf16.mxu0 0
    %322 = vmatpush2.bf16.msra.mxu0 0
    %323 = vmatprep.subr.bf16.mxu0 0
    %324 = vmatpush2.bf16.msra.mxu0 0
    %325 = vmatprep.subr.bf16.mxu0 0
    %326 = vmatpush2.bf16.msra.mxu0 0
    %327 = vmatprep.subr.bf16.mxu0 0
    %328 = vmatpush2.bf16.msra.mxu0 0
    %329 = vmatprep.mubr.bf16.mxu0 0
    %330 = vmatmul.mubr.bf16.gmra.mxu0 %v228
    %v331 = vpop.f32.mrf.mxu0
    %v332 = vadd.f32 %v248, %v331
    %v333 = vpop.f32.mrf.mxu0
    %v334 = vpop.f32.mrf.mxu0
    %v335 = vadd.f32 %v248, %v334
    %v336 = vpop.f32.mrf.mxu0
    %337 = vdwg.mxu0
    %v338 = vsel %vm183, %v332, 0.0
    %v339 = vsel %vm183, %v335, 0.0
    %340 = vadd.xlane.f32.xlu0 %v338
    %v341 = vpop.xlane.xlu0 %340
    %342 = vadd.xlane.f32.xlu0 %v339
    %v343 = vpop.xlane.xlu0 %342
    %v344 = vmul.f32 %v341, 0.03125
    %v345 = vmul.f32 %v343, 0.03125
    %v346 = vsub.f32 %v332, %v344
    %v347 = vsub.f32 %v335, %v345
    %v348 = vsel %vm183, %v346, 0.0
    %v349 = vsel %vm183, %v347, 0.0
    %v350 = vmul.f32 %v348, %v348
    %v351 = vmul.f32 %v349, %v349
    %352 = vadd.xlane.f32.xlu0 %v350
    %v353 = vpop.xlane.xlu0 %352
    %354 = vadd.xlane.f32.xlu0 %v351
    %v355 = vpop.xlane.xlu0 %354
    %v356 = vmul.f32 %v353, 0.03125
    %v357 = vmul.f32 %v355, 0.03125
    %v358 = vadd.f32 %v356, 1e-05
    %v359 = vadd.f32 %v357, 1e-05
    %v360 = vrsqrt.pop %v358
    %v361 = vrsqrt.pop %v359
    %v362 = vmul.f32 %v348, %v360
    %v363 = vmul.f32 %v349, %v361
    %v364 = vlaneseq
    %v365 = vshrl.u32 %v364, 7
    %v366 = vsub.s32 4, %v365
    %v367 = vrot.slane %v62, %v366
    %v368 = vmul.f32 %v362, %v367
    %v369 = vmul.f32 %v363, %v367
    %v370 = vlaneseq
    %v371 = vshrl.u32 %v370, 7
    %v372 = vsub.s32 5, %v371
    %v373 = vrot.slane %v62, %v372
    %v374 = vadd.f32 %v368, %v373
    %v375 = vadd.f32 %v369, %v373
    %vm376 = vcmp.ge.f32.partialorder %v374, 0.0
    %vm377 = vcmp.ge.f32.partialorder %v375, 0.0
    %v378 = vmul.f32 %v374, 0.01
    %v379 = vmul.f32 %v375, 0.01
    %v380 = vsel %vm376, %v374, %v378
    %v381 = vsel %vm377, %v375, %v379
    %v382 = vpack.c.bf16 %v381, %v380
    %v383 = vld [vmem:[#allocation6] sm:$0xf]
    %v384 = vld [vmem:[#allocation6 + $0x4] sm:$0xf]
    %v385 = vld [vmem:[#allocation6 + $0x8] sm:$0xf]
    %v386 = vld [vmem:[#allocation6 + $0xc] sm:$0xf]
    %v387 = vld [vmem:[#allocation6 + $0x10] sm:$0xf]
    %v388 = vld [vmem:[#allocation6 + $0x14] sm:$0xf]
    %v389 = vld [vmem:[#allocation6 + $0x18] sm:$0xf]
    %v390 = vld [vmem:[#allocation6 + $0x1c] sm:$0xf]
    %v391 = vld [vmem:[#allocation6 + $0x20] sm:$0xf]
    %v392 = vld [vmem:[#allocation6 + $0x24] sm:$0xf]
    %v393 = vld [vmem:[#allocation6 + $0x28] sm:$0xf]
    %v394 = vld [vmem:[#allocation6 + $0x2c] sm:$0xf]
    %v395 = vld [vmem:[#allocation6 + $0x30] sm:$0xf]
    %v396 = vld [vmem:[#allocation6 + $0x34] sm:$0xf]
    %v397 = vld [vmem:[#allocation6 + $0x38] sm:$0xf]
    %v398 = vld [vmem:[#allocation6 + $0x3c] sm:$0xf]
    %v399 = vlaneseq
    %v400 = vshrl.u32 %v399, 7
    %v401 = vsub.s32 6, %v400
    %v402 = vrot.slane %v62, %v401
    %v419 = vunpack.c.l.b16 %v383
    %v420 = vunpack.c.l.b16 %v384
    %v421 = vunpack.c.l.b16 %v385
    %v422 = vunpack.c.l.b16 %v386
    %v423 = vunpack.c.l.b16 %v387
    %v424 = vunpack.c.l.b16 %v388
    %v425 = vunpack.c.l.b16 %v389
    %v426 = vunpack.c.l.b16 %v390
    %v427 = vunpack.c.l.b16 %v391
    %v428 = vunpack.c.l.b16 %v392
    %v429 = vunpack.c.l.b16 %v393
    %v430 = vunpack.c.l.b16 %v394
    %v431 = vunpack.c.l.b16 %v395
    %v432 = vunpack.c.l.b16 %v396
    %v433 = vunpack.c.l.b16 %v397
    %v434 = vunpack.c.l.b16 %v398
    %v435 = vpack.c.b16 %v420, %v419
    %v436 = vpack.c.b16 %v422, %v421
    %v437 = vpack.c.b16 %v424, %v423
    %v438 = vpack.c.b16 %v426, %v425
    %v439 = vpack.c.b16 %v428, %v427
    %v440 = vpack.c.b16 %v430, %v429
    %v441 = vpack.c.b16 %v432, %v431
    %v442 = vpack.c.b16 %v434, %v433
    %451 = vmatprep.subr.bf16.mxu0 0
    %452 = vmatpush1.bf16.msra.mxu0 %v442
    %453 = vmatprep.subr.bf16.mxu0 0
    %454 = vmatpush1.bf16.msra.mxu0 %v441
    %455 = vmatprep.subr.bf16.mxu0 0
    %456 = vmatpush1.bf16.msra.mxu0 %v440
    %457 = vmatprep.subr.bf16.mxu0 0
    %458 = vmatpush1.bf16.msra.mxu0 %v439
    %459 = vmatprep.subr.bf16.mxu0 0
    %460 = vmatpush1.bf16.msra.mxu0 %v438
    %461 = vmatprep.subr.bf16.mxu0 0
    %462 = vmatpush1.bf16.msra.mxu0 %v437
    %463 = vmatprep.subr.bf16.mxu0 0
    %464 = vmatpush1.bf16.msra.mxu0 %v436
    %465 = vmatprep.subr.bf16.mxu0 0
    %466 = vmatpush1.bf16.msra.mxu0 %v435
    %467 = vmatprep.subr.bf16.mxu0 0
    %468 = vmatpush2.bf16.msra.mxu0 0
    %469 = vmatprep.subr.bf16.mxu0 0
    %470 = vmatpush2.bf16.msra.mxu0 0
    %471 = vmatprep.subr.bf16.mxu0 0
    %472 = vmatpush2.bf16.msra.mxu0 0
    %473 = vmatprep.subr.bf16.mxu0 0
    %474 = vmatpush2.bf16.msra.mxu0 0
    %475 = vmatprep.subr.bf16.mxu0 0
    %476 = vmatpush2.bf16.msra.mxu0 0
    %477 = vmatprep.subr.bf16.mxu0 0
    %478 = vmatpush2.bf16.msra.mxu0 0
    %479 = vmatprep.subr.bf16.mxu0 0
    %480 = vmatpush2.bf16.msra.mxu0 0
    %481 = vmatprep.subr.bf16.mxu0 0
    %482 = vmatpush2.bf16.msra.mxu0 0
    %483 = vmatprep.mubr.bf16.mxu0 0
    %484 = vmatmul.mubr.bf16.gmra.mxu0 %v382
    %v485 = vpop.f32.mrf.mxu0
    %v486 = vadd.f32 %v402, %v485
    %v487 = vpop.f32.mrf.mxu0
    %v488 = vpop.f32.mrf.mxu0
    %v489 = vadd.f32 %v402, %v488
    %v490 = vpop.f32.mrf.mxu0
    %491 = vdwg.mxu0
    %v492 = vsel %vm183, %v486, 0.0
    %v493 = vsel %vm183, %v489, 0.0
    %494 = vadd.xlane.f32.xlu0 %v492
    %v495 = vpop.xlane.xlu0 %494
    %496 = vadd.xlane.f32.xlu0 %v493
    %v497 = vpop.xlane.xlu0 %496
    %v498 = vmul.f32 %v495, 0.03125
    %v499 = vmul.f32 %v497, 0.03125
    %v500 = vsub.f32 %v486, %v498
    %v501 = vsub.f32 %v489, %v499
    %v502 = vsel %vm183, %v500, 0.0
    %v503 = vsel %vm183, %v501, 0.0
    %v504 = vmul.f32 %v502, %v502
    %v505 = vmul.f32 %v503, %v503
    %506 = vadd.xlane.f32.xlu0 %v504
    %v507 = vpop.xlane.xlu0 %506
    %508 = vadd.xlane.f32.xlu0 %v505
    %v509 = vpop.xlane.xlu0 %508
    %v510 = vmul.f32 %v507, 0.03125
    %v511 = vmul.f32 %v509, 0.03125
    %v512 = vadd.f32 %v510, 1e-05
    %v513 = vadd.f32 %v511, 1e-05
    %v514 = vrsqrt.pop %v512
    %v515 = vrsqrt.pop %v513
    %v516 = vmul.f32 %v502, %v514
    %v517 = vmul.f32 %v503, %v515
    %v518 = vlaneseq
    %v519 = vshrl.u32 %v518, 7
    %v520 = vsub.s32 7, %v519
    %v521 = vrot.slane %v62, %v520
    %v522 = vmul.f32 %v516, %v521
    %v523 = vmul.f32 %v517, %v521
    %v524 = vlaneseq
    %v525 = vshrl.u32 %v524, 7
    %v526 = vsub.s32 0, %v525
    %v527 = vrot.slane %v63, %v526
    %v528 = vadd.f32 %v522, %v527
    %v529 = vadd.f32 %v523, %v527
    %vm530 = vcmp.ge.f32.partialorder %v528, 0.0
    %vm531 = vcmp.ge.f32.partialorder %v529, 0.0
    %v532 = vmul.f32 %v528, 0.01
    %v533 = vmul.f32 %v529, 0.01
    %v534 = vsel %vm530, %v528, %v532
    %v535 = vsel %vm531, %v529, %v533
    %536 = vst [vmem:[%s5] sm:$0xff] %v534
    %537 = vst [vmem:[%s5 + $0x8] sm:$0xff] %v535
    // Predicated region
    $region34: #{mlp_apply.1} parent=1 // pred_check
      _
    $region35: #{mlp_apply.1} parent=1 // pred_check_branch
      %539 = sbr.rel (0) target = $region37
    $region36: #{mlp_apply.1} parent=1 // pred_region
      _
    $region37: #{mlp_apply.1} parent=1 // pred_fallthru
      _
    // Predicated region
    $region38: #{mlp_apply.1} parent=1 // pred_check
      _
    $region39: #{mlp_apply.1} parent=1 // pred_check_branch
      %541 = sbr.rel (0) target = $region41
    $region40: #{mlp_apply.1} parent=1 // pred_region
      _
    $region41: #{mlp_apply.1} parent=1 // pred_fallthru
      _
    %542 = vsyncpa [#allocation3], 1
    %543 = vsyncpa [#allocation5], 1

</llo_original>
